<compile_context>
chip_gen: v7x
topology: tpu7x:2x2x1
jax: 0.10.0
libtpu: 0.0.40
codegen_flags: <defaults>
</compile_context>

<pallas_src>
import math
import numpy as np

import jax
import jax.numpy as jnp
from jax import lax
from jax.experimental import pallas as pl
from jax.experimental.pallas import tpu as pltpu


def _make_flash_kernel(seq_len, orig_len, head_dim, tq, tk, causal, compute_dtype):
    scale = 1.0 / math.sqrt(head_dim)
    num_kv = seq_len // tk
    padded = orig_len < seq_len

    def kernel(q_ref, k_ref, v_ref, o_ref, m_sc, l_sc, acc_sc, qs_sc):
        # blocks: q/o (TB, TQ, D); k/v (TB, TK, D)
        qi = pl.program_id(1)
        kv = pl.program_id(2)

        @pl.when(kv == 0)
        def _init():
            m_sc[...] = jnp.full(m_sc.shape, -jnp.inf, dtype=jnp.float32)
            l_sc[...] = jnp.zeros(l_sc.shape, dtype=jnp.float32)
            acc_sc[...] = jnp.zeros(acc_sc.shape, dtype=jnp.float32)
            # Fold 1/sqrt(D) into q once per q-tile (q block is resident across
            # the kv axis) and cast to the bf16 MXU compute dtype.
            qs_sc[...] = (q_ref[...].astype(jnp.float32) * scale).astype(compute_dtype)

        def _compute():
            q = qs_sc[...]                                   # (TB, TQ, D) bf16
            k = k_ref[...].astype(compute_dtype)             # (TB, TK, D) bf16
            # QK^T without a materialized transpose: contract over D directly.
            s = jnp.einsum("bqd,bkd->bqk", q, k,
                           preferred_element_type=jnp.float32)  # f32 scores

            if causal or padded:
                col = lax.broadcasted_iota(jnp.int32, (tq, tk), 1) + kv * tk
                keep = None
                if causal:
                    row = lax.broadcasted_iota(jnp.int32, (tq, tk), 0) + qi * tq
                    keep = col <= row
                if padded:
                    pad_keep = col < orig_len
                    keep = pad_keep if keep is None else jnp.logical_and(keep, pad_keep)
                s = jnp.where(keep[None, :, :], s, -jnp.inf)

            m_prev = m_sc[...]
            m_new = jnp.maximum(m_prev, jnp.max(s, axis=-1, keepdims=True))
            alpha = jnp.exp(m_prev - m_new)                  # first tile: exp(-inf)=0
            p = jnp.exp(s - m_new)                           # masked entries -> 0
            l_sc[...] = alpha * l_sc[...] + jnp.sum(p, axis=-1, keepdims=True)
            acc_sc[...] = alpha * acc_sc[...] + jnp.einsum(
                "bqk,bkd->bqd",
                p.astype(compute_dtype),
                v_ref[...].astype(compute_dtype),
                preferred_element_type=jnp.float32)
            m_sc[...] = m_new

        if causal:
            # Skip kv tiles strictly above the diagonal (TQ == TK => kv <= qi).
            pl.when(kv <= qi)(_compute)
            finalize_cond = kv == qi          # last kv tile needed for this row tile
        else:
            _compute()
            finalize_cond = kv == num_kv - 1

        @pl.when(finalize_cond)
        def _finalize():
            # Normalize once with the EUP approximate reciprocal.
            inv_l = pl.reciprocal(l_sc[...], approx=True)
            o_ref[...] = (acc_sc[...] * inv_l).astype(o_ref.dtype)

    return kernel


def _choose_seq_tile(seq_len):
    """Return (tile, padded_seq_len).  Tiny S -> whole-seq tile; otherwise pad
    S to a multiple of 128 and use the largest of (512, 256, 128) that divides
    the padded length (no whole-S fallback for large non-divisible S)."""
    if seq_len <= 128:
        return seq_len, seq_len
    padded = ((seq_len + 127) // 128) * 128
    for t in (512, 256, 128):
        if padded % t == 0:
            return t, padded
    return 128, padded  # unreachable: padded is a multiple of 128


def _choose_bh_tile(bh, tq, head_dim, itemsize, max_block_bytes=256 * 1024):
    """Batch several (batch*head) rows per grid step; largest divisor of BH
    (<= 64) keeping each block under ~256 KiB."""
    per_row = max(tq * head_dim * itemsize, 1)
    cap = max(1, min(64, max_block_bytes // per_row))
    cap = min(cap, bh)
    for tb in range(cap, 0, -1):
        if bh % tb == 0:
            return tb
    return 1


def _ensure_parallel_extent(bh, tb, num_q):
    """v7x has 2 TensorCores sharing HBM: make the 'parallel' grid axes expose
    >= 2 steps by shrinking tb rather than leaving a core idle."""
    while tb > 1 and (bh // tb) * num_q < 2:
        tb -= 1
        while tb > 1 and bh % tb != 0:
            tb -= 1
    return max(tb, 1)


def _vmem_limit_bytes(tb, tq, tk, d, in_dtype, out_dtype, compute_dtype):
    in_sz = jnp.dtype(in_dtype).itemsize
    out_sz = jnp.dtype(out_dtype).itemsize
    c_sz = jnp.dtype(compute_dtype).itemsize
    blocks = 2 * (tb * tq * d * in_sz            # q (double-buffered)
                  + 2 * tb * tk * d * in_sz      # k, v
                  + tb * tq * d * out_sz)        # o
    scratch = tb * tq * (2 * 4 + d * 4 + d * c_sz)   # m, l, acc, scaled-q
    budget = blocks + scratch
    # Generous headroom for compiler-internal scratch; clamp to v7x's 64 MiB
    # physical VMEM (v5e/v6e have 128 MiB physical, so this is safe everywhere;
    # it also raises v5e's 16 MiB default scoped limit).
    return int(min(64 << 20, max(32 << 20, 2 * budget + (4 << 20))))


def _flat_attention(qf, kf, vf, causal):
    """qf/kf/vf: (BH, S, D) -> (BH, S, D) via flash-style tiled attention."""
    BH, S, D = qf.shape
    tq, s_pad = _choose_seq_tile(S)
    tk = tq                    # TQ == TK is load-bearing for causal tile-skip safety
    if s_pad != S:
        padw = ((0, 0), (0, s_pad - S), (0, 0))
        qf = jnp.pad(qf, padw)
        kf = jnp.pad(kf, padw)
        vf = jnp.pad(vf, padw)

    num_q = s_pad // tq
    num_kv = s_pad // tk
    itemsize = jnp.dtype(qf.dtype).itemsize
    tb = _choose_bh_tile(BH, tq, D, itemsize)
    tb = _ensure_parallel_extent(BH, tb, num_q)

    compute_dtype = jnp.bfloat16
    kernel = _make_flash_kernel(s_pad, S, D, tq, tk, causal, compute_dtype)

    qo_spec = pl.BlockSpec((tb, tq, D), lambda b, qi, kv: (b, qi, 0))
    if causal:
        # Clamp the kv block index to the diagonal: Pallas elides DMAs when the
        # block index is revisited, so upper-triangle K/V tiles are never fetched.
        kv_idx = lambda b, qi, kv: (b, jnp.minimum(kv, qi), 0)
    else:
        kv_idx = lambda b, qi, kv: (b, kv, 0)
    kv_spec = pl.BlockSpec((tb, tk, D), kv_idx)

    vmem_limit = _vmem_limit_bytes(tb, tq, tk, D, qf.dtype, qf.dtype, compute_dtype)

    out = pl.pallas_call(
        kernel,
        out_shape=jax.ShapeDtypeStruct((BH, s_pad, D), qf.dtype),
        grid_spec=pltpu.PrefetchScalarGridSpec(
            num_scalar_prefetch=0,
            grid=(BH // tb, num_q, num_kv),
            in_specs=[qo_spec, kv_spec, kv_spec],
            out_specs=qo_spec,
            scratch_shapes=[
                pltpu.VMEM((tb, tq, 1), jnp.float32),     # m (running max)
                pltpu.VMEM((tb, tq, 1), jnp.float32),     # l (running denom)
                pltpu.VMEM((tb, tq, D), jnp.float32),     # acc (unnormalized out)
                pltpu.VMEM((tb, tq, D), compute_dtype),   # scaled bf16 q (hoisted)
            ],
        ),
        compiler_params=pltpu.CompilerParams(
            # BH and q-tile axes parallel (megacore sharding); kv reduction
            # axis arbitrary and last.
            dimension_semantics=("parallel", "parallel", "arbitrary"),
            vmem_limit_bytes=vmem_limit,
        ),
    )(qf, kf, vf)

    if s_pad != S:
        out = out[:, :S, :]
    return out


class NDimFullAttention:
    """JAX/Pallas port of the PyTorch NDimFullAttention module (eval mode)."""

    def __init__(self, shape, causal, attn_dropout):
        self.shape = tuple(shape)
        self.causal = bool(causal)
        # TODO(synk): attention dropout (F.dropout) is a no-op here (eval mode /
        # attn_dropout=0.0); training would need the stateful pltpu PRNG.
        self.attn_dropout = float(attn_dropout)
        self.seq_len = int(np.prod(self.shape))

    def __call__(self, q, k, v, decode_step=None, decode_idx=None):
        # q, k, v: (B, H, *shape, D)
        if decode_step is not None:
            # TODO(synk): single-row decode-step masking path not implemented
            # (only the full-sequence forward is supported).
            raise NotImplementedError("decode_step path not implemented")

        old_shape = q.shape[2:-1]
        B, H = q.shape[0], q.shape[1]
        D = q.shape[-1]
        S = int(np.prod(old_shape))

        qf = q.reshape(B * H, S, D)
        kf = k.reshape(B * H, S, D)
        vf = v.reshape(B * H, S, D)

        out = _flat_attention(qf, kf, vf, self.causal)
        return out.reshape(B, H, *old_shape, D)


def _reference_attention(q, k, v, causal):
    """Pure-JAX reference matching the PyTorch semantics (eval, no dropout)."""
    old_shape = q.shape[2:-1]
    B, H, D = q.shape[0], q.shape[1], q.shape[-1]
    S = int(np.prod(old_shape))
    qf = q.reshape(B, H, S, D)
    kf = k.reshape(B, H, S, D)
    vf = v.reshape(B, H, S, D)
    attn = jnp.einsum("bhqd,bhkd->bhqk", qf, kf) / np.sqrt(D)
    if causal:
        mask = np.tril(np.ones((S, S), dtype=np.float32))
        attn = jnp.where(mask == 0, -jnp.inf, attn)
    attn = jax.nn.softmax(attn.astype(jnp.float32), axis=-1).astype(qf.dtype)
    out = jnp.einsum("bhqk,bhkd->bhqd", attn, vf)
    return out.reshape(B, H, *old_shape, D)


def _run_case(key, spatial_shape, B, H, D, causal, atol=2e-2, rtol=2e-2):
    # Tolerance reflects the deliberate bf16 MXU operands (f32 accumulation);
    # structural bugs (masking/normalization) would produce errors >> 2e-2.
    kq, kk, kv_ = jax.random.split(key, 3)
    q = jax.random.normal(kq, (B, H, *spatial_shape, D), dtype=jnp.float32)
    k = jax.random.normal(kk, (B, H, *spatial_shape, D), dtype=jnp.float32)
    v = jax.random.normal(kv_, (B, H, *spatial_shape, D), dtype=jnp.float32)

    attn = NDimFullAttention(shape=spatial_shape, causal=causal, attn_dropout=0.0)
    out = jax.block_until_ready(attn(q, k, v, decode_step=None, decode_idx=None))
    ref = jax.block_until_ready(_reference_attention(q, k, v, causal))

    np.testing.assert_allclose(np.asarray(out), np.asarray(ref), atol=atol, rtol=rtol)
    assert out.shape == (B, H, *spatial_shape, D)


if __name__ == "__main__":
    key = jax.random.PRNGKey(0)
    k1, k2, k3, k4 = jax.random.split(key, 4)

    # Case 1: module-typical tiny shapes (spatial (4,4) -> S=16), causal.
    _run_case(k1, spatial_shape=(4, 4), B=2, H=2, D=32, causal=True)

    # Case 2: larger spatial shape exercising the tiled flash path with the
    # causal K/V DMA clamp + early finalize (S=1024 -> 2x2 q/kv tiles).
    _run_case(k2, spatial_shape=(32, 32), B=2, H=2, D=32, causal=True)

    # Case 3: non-causal path.
    _run_case(k3, spatial_shape=(4, 4), B=2, H=2, D=32, causal=False)

    # Case 4: S not a multiple of 128 (S=192 -> padded to 256, key-pad masking).
    _run_case(k4, spatial_shape=(12, 16), B=2, H=2, D=32, causal=True)

    print("KERNEL_OK")
</pallas_src>

<mosaic_0001>
module attributes {stable_mosaic.version = 11 : i64} {
  func.func @kernel(%arg0: i32, %arg1: i32, %arg2: i32, %arg3: memref<2x16x32xf32, #tpu.memory_space<vmem>>, %arg4: memref<2x16x32xf32, #tpu.memory_space<vmem>>, %arg5: memref<2x16x32xf32, #tpu.memory_space<vmem>>, %arg6: memref<2x16x32xf32, #tpu.memory_space<vmem>>, %arg7: memref<2x16x1xf32, #tpu.memory_space<vmem>>, %arg8: memref<2x16x1xf32, #tpu.memory_space<vmem>>, %arg9: memref<2x16x32xf32, #tpu.memory_space<vmem>>, %arg10: memref<2x16x32xbf16, #tpu.memory_space<vmem>>) attributes {dimension_semantics = [#tpu.dimension_semantics<parallel>, #tpu.dimension_semantics<parallel>, #tpu.dimension_semantics<arbitrary>], iteration_bounds = array<i64: 2, 1, 1>, scalar_prefetch = 0 : i64, scratch_operands = 4 : i64, tpu.core_type = #tpu.core_type<tc>, window_params = [{transform_indices = @transform_0, window_bounds = array<i64: 2, 16, 32>}, {transform_indices = @transform_1, window_bounds = array<i64: 2, 16, 32>}, {transform_indices = @transform_2, window_bounds = array<i64: 2, 16, 32>}, {transform_indices = @transform_3, window_bounds = array<i64: 2, 16, 32>}]} {
    %c0_i32 = arith.constant 0 : i32
    %0 = arith.cmpi eq, %arg2, %c0_i32 : i32
    %1 = arith.extui %0 : i1 to i32
    %c0_i32_0 = arith.constant 0 : i32
    %2 = arith.cmpi ne, %1, %c0_i32_0 : i32
    scf.if %2 {
      %cst = arith.constant 0xFF800000 : f32
      %9 = vector.broadcast %cst : f32 to vector<2x16x1xf32>
      %c0 = arith.constant 0 : index
      %c0_3 = arith.constant 0 : index
      %c0_4 = arith.constant 0 : index
      %10 = vector.load %arg7[%c0, %c0_3, %c0_4] : memref<2x16x1xf32, #tpu.memory_space<vmem>>, vector<2x16x1xf32>
      tpu.vector_store %arg7[%c0, %c0_3, %c0_4], %9 {strides = array<i32>} : memref<2x16x1xf32, #tpu.memory_space<vmem>>, vector<2x16x1xf32>,
      %cst_5 = arith.constant 0.000000e+00 : f32
      %11 = vector.broadcast %cst_5 : f32 to vector<2x16x1xf32>
      %c0_6 = arith.constant 0 : index
      %c0_7 = arith.constant 0 : index
      %c0_8 = arith.constant 0 : index
      %12 = vector.load %arg8[%c0_6, %c0_7, %c0_8] : memref<2x16x1xf32, #tpu.memory_space<vmem>>, vector<2x16x1xf32>
      tpu.vector_store %arg8[%c0_6, %c0_7, %c0_8], %11 {strides = array<i32>} : memref<2x16x1xf32, #tpu.memory_space<vmem>>, vector<2x16x1xf32>,
      %cst_9 = arith.constant 0.000000e+00 : f32
      %13 = vector.broadcast %cst_9 : f32 to vector<2x16x32xf32>
      %c0_10 = arith.constant 0 : index
      %c0_11 = arith.constant 0 : index
      %c0_12 = arith.constant 0 : index
      %14 = vector.load %arg9[%c0_10, %c0_11, %c0_12] : memref<2x16x32xf32, #tpu.memory_space<vmem>>, vector<2x16x32xf32>
      tpu.vector_store %arg9[%c0_10, %c0_11, %c0_12], %13 {strides = array<i32>} : memref<2x16x32xf32, #tpu.memory_space<vmem>>, vector<2x16x32xf32>,
      %c0_13 = arith.constant 0 : index
      %c0_14 = arith.constant 0 : index
      %c0_15 = arith.constant 0 : index
      %15 = vector.load %arg3[%c0_13, %c0_14, %c0_15] : memref<2x16x32xf32, #tpu.memory_space<vmem>>, vector<2x16x32xf32>
      %cst_16 = arith.constant 0.176776692 : f32
      %16 = vector.broadcast %cst_16 : f32 to vector<2x16x32xf32>
      %17 = arith.mulf %15, %16 : vector<2x16x32xf32>
      %18 = arith.truncf %17 : vector<2x16x32xf32> to vector<2x16x32xbf16>
      %c0_17 = arith.constant 0 : index
      %c0_18 = arith.constant 0 : index
      %c0_19 = arith.constant 0 : index
      %19 = vector.load %arg10[%c0_17, %c0_18, %c0_19] : memref<2x16x32xbf16, #tpu.memory_space<vmem>>, vector<2x16x32xbf16>
      tpu.vector_store %arg10[%c0_17, %c0_18, %c0_19], %18 {strides = array<i32>} : memref<2x16x32xbf16, #tpu.memory_space<vmem>>, vector<2x16x32xbf16>,
    } else {
    }
    %3 = arith.cmpi sle, %arg2, %arg1 : i32
    %4 = arith.extui %3 : i1 to i32
    %c0_i32_1 = arith.constant 0 : i32
    %5 = arith.cmpi ne, %4, %c0_i32_1 : i32
    scf.if %5 {
      %c0 = arith.constant 0 : index
      %c0_3 = arith.constant 0 : index
      %c0_4 = arith.constant 0 : index
      %9 = vector.load %arg10[%c0, %c0_3, %c0_4] : memref<2x16x32xbf16, #tpu.memory_space<vmem>>, vector<2x16x32xbf16>
      %c0_5 = arith.constant 0 : index
      %c0_6 = arith.constant 0 : index
      %c0_7 = arith.constant 0 : index
      %10 = vector.load %arg4[%c0_5, %c0_6, %c0_7] : memref<2x16x32xf32, #tpu.memory_space<vmem>>, vector<2x16x32xf32>
      %11 = arith.truncf %10 : vector<2x16x32xf32> to vector<2x16x32xbf16>
      "tpu.trace_start"() <{level = 10 : i32, message = "bqd,bkd->bqk"}> : () -> ()
      %cst = arith.constant dense<0.000000e+00> : vector<2x16x16xf32>
      %12 = tpu.matmul %9, %11, %cst {dimension_numbers = #tpu.dot_dimension_numbers<[2], [2], [1], [1], [0, 0, 0, 1, 1, 1], [0], [0]>} : vector<2x16x32xbf16>, vector<2x16x32xbf16>, vector<2x16x16xf32> -> vector<2x16x16xf32>
      "tpu.trace_stop"() : () -> ()
      %13 = tpu.iota {dimensions = array<i32: 1>} : vector<16x16xi32>
      %c16_i32 = arith.constant 16 : i32
      %14 = arith.muli %arg2, %c16_i32 : i32
      %15 = vector.broadcast %14 : i32 to vector<16x16xi32>
      %16 = arith.addi %13, %15 : vector<16x16xi32>
      %17 = tpu.iota {dimensions = array<i32: 0>} : vector<16x16xi32>
      %c16_i32_8 = arith.constant 16 : i32
      %18 = arith.muli %arg1, %c16_i32_8 : i32
      %19 = vector.broadcast %18 : i32 to vector<16x16xi32>
      %20 = arith.addi %17, %19 : vector<16x16xi32>
      %21 = arith.cmpi sle, %16, %20 : vector<16x16xi32>
      %22 = vector.shape_cast %21 : vector<16x16xi1> to vector<1x16x16xi1>
      %cst_9 = arith.constant 0xFF800000 : f32
      %23 = vector.shape_cast %22 : vector<1x16x16xi1> to vector<1x16x16xi1>
      %24 = vector.broadcast %23 : vector<1x16x16xi1> to vector<2x16x16xi1>
      %25 = vector.broadcast %cst_9 : f32 to vector<2x16x16xf32>
      %26 = arith.select %24, %12, %25 : vector<2x16x16xi1>, vector<2x16x16xf32>
      %c0_10 = arith.constant 0 : index
      %c0_11 = arith.constant 0 : index
      %c0_12 = arith.constant 0 : index
      %27 = vector.load %arg7[%c0_10, %c0_11, %c0_12] : memref<2x16x1xf32, #tpu.memory_space<vmem>>, vector<2x16x1xf32>
      %cst_13 = arith.constant dense<0xFF800000> : vector<2x16xf32>
      %28 = vector.multi_reduction <maximumf>, %26, %cst_13 [2] : vector<2x16x16xf32> to vector<2x16xf32>
      %29 = vector.shape_cast %28 : vector<2x16xf32> to vector<2x16x1xf32>
      %30 = arith.maximumf %27, %29 : vector<2x16x1xf32>
      %31 = arith.subf %27, %30 : vector<2x16x1xf32>
      %32 = math.exp %31 : vector<2x16x1xf32>
      %33 = vector.broadcast %30 : vector<2x16x1xf32> to vector<2x16x16xf32>
      %34 = arith.subf %26, %33 : vector<2x16x16xf32>
      %35 = math.exp %34 : vector<2x16x16xf32>
      %c0_14 = arith.constant 0 : index
      %c0_15 = arith.constant 0 : index
      %c0_16 = arith.constant 0 : index
      %36 = vector.load %arg8[%c0_14, %c0_15, %c0_16] : memref<2x16x1xf32, #tpu.memory_space<vmem>>, vector<2x16x1xf32>
      %37 = arith.mulf %32, %36 : vector<2x16x1xf32>
      %cst_17 = arith.constant dense<0.000000e+00> : vector<2x16xf32>
      %38 = vector.multi_reduction <add>, %35, %cst_17 [2] : vector<2x16x16xf32> to vector<2x16xf32>
      %39 = vector.shape_cast %38 : vector<2x16xf32> to vector<2x16x1xf32>
      %40 = arith.addf %37, %39 : vector<2x16x1xf32>
      %c0_18 = arith.constant 0 : index
      %c0_19 = arith.constant 0 : index
      %c0_20 = arith.constant 0 : index
      %41 = vector.load %arg8[%c0_18, %c0_19, %c0_20] : memref<2x16x1xf32, #tpu.memory_space<vmem>>, vector<2x16x1xf32>
      tpu.vector_store %arg8[%c0_18, %c0_19, %c0_20], %40 {strides = array<i32>} : memref<2x16x1xf32, #tpu.memory_space<vmem>>, vector<2x16x1xf32>,
      %c0_21 = arith.constant 0 : index
      %c0_22 = arith.constant 0 : index
      %c0_23 = arith.constant 0 : index
      %42 = vector.load %arg9[%c0_21, %c0_22, %c0_23] : memref<2x16x32xf32, #tpu.memory_space<vmem>>, vector<2x16x32xf32>
      %43 = vector.broadcast %32 : vector<2x16x1xf32> to vector<2x16x32xf32>
      %44 = arith.mulf %43, %42 : vector<2x16x32xf32>
      %45 = arith.truncf %35 : vector<2x16x16xf32> to vector<2x16x16xbf16>
      %c0_24 = arith.constant 0 : index
      %c0_25 = arith.constant 0 : index
      %c0_26 = arith.constant 0 : index
      %46 = vector.load %arg5[%c0_24, %c0_25, %c0_26] : memref<2x16x32xf32, #tpu.memory_space<vmem>>, vector<2x16x32xf32>
      %47 = arith.truncf %46 : vector<2x16x32xf32> to vector<2x16x32xbf16>
      "tpu.trace_start"() <{level = 10 : i32, message = "bqk,bkd->bqd"}> : () -> ()
      %cst_27 = arith.constant dense<0.000000e+00> : vector<2x16x32xf32>
      %48 = tpu.matmul %45, %47, %cst_27 {dimension_numbers = #tpu.dot_dimension_numbers<[2], [1], [1], [2], [0, 0, 0, 1, 1, 2], [0], [0]>} : vector<2x16x16xbf16>, vector<2x16x32xbf16>, vector<2x16x32xf32> -> vector<2x16x32xf32>
      "tpu.trace_stop"() : () -> ()
      %49 = arith.addf %44, %48 : vector<2x16x32xf32>
      %c0_28 = arith.constant 0 : index
      %c0_29 = arith.constant 0 : index
      %c0_30 = arith.constant 0 : index
      %50 = vector.load %arg9[%c0_28, %c0_29, %c0_30] : memref<2x16x32xf32, #tpu.memory_space<vmem>>, vector<2x16x32xf32>
      tpu.vector_store %arg9[%c0_28, %c0_29, %c0_30], %49 {strides = array<i32>} : memref<2x16x32xf32, #tpu.memory_space<vmem>>, vector<2x16x32xf32>,
      %c0_31 = arith.constant 0 : index
      %c0_32 = arith.constant 0 : index
      %c0_33 = arith.constant 0 : index
      %51 = vector.load %arg7[%c0_31, %c0_32, %c0_33] : memref<2x16x1xf32, #tpu.memory_space<vmem>>, vector<2x16x1xf32>
      tpu.vector_store %arg7[%c0_31, %c0_32, %c0_33], %30 {strides = array<i32>} : memref<2x16x1xf32, #tpu.memory_space<vmem>>, vector<2x16x1xf32>,
    } else {
    }
    %6 = arith.cmpi eq, %arg2, %arg1 : i32
    %7 = arith.extui %6 : i1 to i32
    %c0_i32_2 = arith.constant 0 : i32
    %8 = arith.cmpi ne, %7, %c0_i32_2 : i32
    scf.if %8 {
      %c0 = arith.constant 0 : index
      %c0_3 = arith.constant 0 : index
      %c0_4 = arith.constant 0 : index
      %9 = vector.load %arg8[%c0, %c0_3, %c0_4] : memref<2x16x1xf32, #tpu.memory_space<vmem>>, vector<2x16x1xf32>
      %10 = tpu.reciprocal %9 {approx = true} : vector<2x16x1xf32> -> vector<2x16x1xf32>
      %c0_5 = arith.constant 0 : index
      %c0_6 = arith.constant 0 : index
      %c0_7 = arith.constant 0 : index
      %11 = vector.load %arg9[%c0_5, %c0_6, %c0_7] : memref<2x16x32xf32, #tpu.memory_space<vmem>>, vector<2x16x32xf32>
      %12 = vector.broadcast %10 : vector<2x16x1xf32> to vector<2x16x32xf32>
      %13 = arith.mulf %11, %12 : vector<2x16x32xf32>
      %c0_8 = arith.constant 0 : index
      %c0_9 = arith.constant 0 : index
      %c0_10 = arith.constant 0 : index
      %14 = vector.load %arg6[%c0_8, %c0_9, %c0_10] : memref<2x16x32xf32, #tpu.memory_space<vmem>>, vector<2x16x32xf32>
      tpu.vector_store %arg6[%c0_8, %c0_9, %c0_10], %13 {strides = array<i32>} : memref<2x16x32xf32, #tpu.memory_space<vmem>>, vector<2x16x32xf32>,
    } else {
    }
    return
  }
  func.func @transform_0(%arg0: i32, %arg1: i32, %arg2: i32) -> (i32, i32, i32) {
    %c0_i32 = arith.constant 0 : i32
    %c0_i32_0 = arith.constant 0 : i32
    return %arg0, %arg1, %c0_i32 : i32, i32, i32
  }
  func.func @transform_1(%arg0: i32, %arg1: i32, %arg2: i32) -> (i32, i32, i32) {
    %0 = arith.minsi %arg2, %arg1 : i32
    %c0_i32 = arith.constant 0 : i32
    %c0_i32_0 = arith.constant 0 : i32
    return %arg0, %0, %c0_i32 : i32, i32, i32
  }
  func.func @transform_2(%arg0: i32, %arg1: i32, %arg2: i32) -> (i32, i32, i32) {
    %0 = arith.minsi %arg2, %arg1 : i32
    %c0_i32 = arith.constant 0 : i32
    %c0_i32_0 = arith.constant 0 : i32
    return %arg0, %0, %c0_i32 : i32, i32, i32
  }
  func.func @transform_3(%arg0: i32, %arg1: i32, %arg2: i32) -> (i32, i32, i32) {
    %c0_i32 = arith.constant 0 : i32
    %c0_i32_0 = arith.constant 0 : i32
    return %arg0, %arg1, %c0_i32 : i32, i32, i32
  }
}

</mosaic_0001>

<llo_original>
// kernel: tpu_custom_call.1
$region0: #{tpu_custom_call.1}
  #allocation0 [shape = 'u32[]', space=smem, size = 0x4, offset = 0x4, fixed_abs, tag = 'smem constant byte address 0x4 - core index']
  #allocation1 [shape = 'u32[144,128]{1,0:T(1,128)}', space=vmem, size = 0x12000, scoped, tag = 'internal scratch']
  #allocation2 [shape = 'f32[2,16,1]{2,1,0:T(8,128)}', space=vmem, size = 0x4000, scoped, tag = 'scratch operand']
  #allocation3 [shape = 'f32[2,16,1]{2,1,0:T(8,128)}', space=vmem, size = 0x4000, scoped, tag = 'scratch operand']
  #allocation4 [shape = 'f32[2,16,32]{2,1,0:T(8,128)}', space=vmem, size = 0x4000, scoped, tag = 'scratch operand']
  #allocation5 [shape = 'bf16[2,16,32]{2,1,0:T(16,128)(2,1)}', space=vmem, size = 0x2000, scoped, tag = 'scratch operand']
  %s0 = inlined_call_operand.hbm [shape: f32[4,16,32], index: 0, kind: input, shape index: {}]
  %s1 = inlined_call_operand.hbm [shape: f32[4,16,32], index: 1, kind: input, shape index: {}]
  %s2 = inlined_call_operand.hbm [shape: f32[4,16,32], index: 2, kind: input, shape index: {}]
  %s3 = inlined_call_operand.hbm [shape: f32[4,16,32], index: 3, kind: output, shape index: {}]
  %s4 = sld [smem:[#allocation0]]
  $region69: #{tpu_custom_call.1} parent=0
    _
  %s6 = ssub.s32 1, %s4
  %s7 = scalar_select 0, %s6, %s4
  $region1: #{tpu_custom_call.1} parent=0
    #allocation6 [shape = 'u8[32768]{0}', space=vmem, size = 0x8000, scoped, tag = 'input window, operand 0']
    #allocation7 [shape = 's32[2]{0}', space=sflag, size = 0x8, scoped, tag = 'scoped memory for tpu_custom_call.1']
    #allocation8 [shape = 's32[2]{0}', space=sflag, size = 0x8, scoped, tag = 'scoped memory for tpu_custom_call.1']
    #allocation9 [shape = 'u8[32768]{0}', space=vmem, size = 0x8000, scoped, tag = 'input window, operand 1']
    #allocation10 [shape = 's32[2]{0}', space=sflag, size = 0x8, scoped, tag = 'scoped memory for tpu_custom_call.1']
    #allocation11 [shape = 'u8[32768]{0}', space=vmem, size = 0x8000, scoped, tag = 'input window, operand 2']
    #allocation12 [shape = 'u8[32768]{0}', space=vmem, size = 0x8000, scoped, tag = 'output window, operand 0']
    %8 = vsyncpa [#allocation7], 0
    %s9 = scalar_lea.sflag [#allocation7], 1
    %10 = vsyncpa %s9, 0
    %11 = vsyncpa [#allocation10], 0
    %s12 = scalar_lea.sflag [#allocation10], 1
    %13 = vsyncpa %s12, 0
    %14 = vsyncpa [#allocation8], 0
    %s15 = scalar_lea.sflag [#allocation8], 1
    %16 = vsyncpa %s15, 0
    loop: start=0, step=1, limit=4
    $region2: #{tpu_custom_call.1} parent=1 // loop_pre_header
      _
    $region3: #{tpu_custom_call.1} parent=1 // loop_header
      %s18 = sphi 0, %s22
      %p19 = scmp.ge.s32.totalorder %s18, 4
      %s25 = sphi 0, %s44
      %s26 = sphi 0, %s40
      %s27 = sphi 0, %s36
      %s28 = sphi 0, %s25
      %s29 = sphi 0, %s26
      %s30 = sphi 0, %s27
      %s31 = sphi 0, %s28
      %s32 = sphi 0, %s29
      %s33 = sphi 0, %s30
      %s49 = sphi 0, %s51
      %s52 = sphi 0, %s49
      %s53 = sphi 0, %s52
      %s69 = sphi 0, %s53
      %s81 = sphi 0, %s83
      %s84 = sphi 0, %s81
      %s85 = sphi 0, %s84
      %s101 = sphi 0, %s85
      %s113 = sphi 0, %s115
      %s116 = sphi 0, %s113
      %s117 = sphi 0, %s116
      %s133 = sphi 0, %s117
      %s141 = sphi 0, %s143
      %s144 = sphi 0, %s141
      %s145 = sphi 0, %s144
      %s161 = sphi 0, %s145
    $region4: #{tpu_custom_call.1} parent=1 // loop_header_branch
      %21 = sbr.rel (%p19) target = $region8
    $region5: #{tpu_custom_call.1} parent=1 // loop_body
      %s23 = ssub.s32 %s18, 1
      %s24 = ssub.s32 %s18, 2
      %s34 = sadd.s32 1, %s27
      %p35 = scmp.ge.s32.totalorder %s34, 1
      %s36 = scalar_select %p35, 0, %s34
      %s37 = sadd.s32 1, %s26
      %s38 = scalar_select %p35, %s37, %s26
      %p39 = scmp.ge.s32.totalorder %s38, 1
      %s40 = scalar_select %p39, 0, %s38
      %s41 = sadd.s32 1, %s25
      %s42 = scalar_select %p39, %s41, %s25
      %p43 = scmp.ge.s32.totalorder %s42, 2
      %s44 = scalar_select %p43, 0, %s42
      %s45 = ssub.s32 %s25, %s44
      %s46 = ssub.s32 %s26, %s40
      %s47 = sor.u32 %s45, %s46
      %p48 = scmp.eq.s32.totalorder %s47, 0
      %s50 = sadd.s32 %s49, 1
      %s51 = scalar_select %p48, %s49, %s50
      %p54 = pneg %p48
      %p55 = scmp.eq.s32.totalorder %s18, 1
      %p56 = por %p54, %p55
      %p57 = scmp.ne.s32.totalorder %s49, %s52
      %p58 = scmp.eq.s32.totalorder %s18, 0
      %p59 = por %p57, %p58
      %p60 = scmp.ne.s32.totalorder %s49, %s52
      %p61 = scmp.eq.s32.totalorder %s23, 1
      %p62 = por %p60, %p61
      %p63 = scmp.ne.s32.totalorder %s52, %s53
      %p64 = scmp.eq.s32.totalorder %s23, 0
      %p65 = por %p63, %p64
      %p66 = scmp.ne.s32.totalorder %s52, %s53
      %p67 = scmp.eq.s32.totalorder %s24, 1
      %p68 = por %p66, %p67
      %p70 = scmp.ne.s32.totalorder %s53, %s69
      %p71 = scmp.eq.s32.totalorder %s24, 0
      %p72 = por %p70, %p71
      %p73 = scmp.lt.s32.totalorder %s27, %s26
      %s74 = scalar_select %p73, %s27, %s26
      %p75 = scmp.lt.s32.totalorder %s36, %s40
      %s76 = scalar_select %p75, %s36, %s40
      %s77 = ssub.s32 %s25, %s44
      %s78 = ssub.s32 %s74, %s76
      %s79 = sor.u32 %s77, %s78
      %p80 = scmp.eq.s32.totalorder %s79, 0
      %s82 = sadd.s32 %s81, 1
      %s83 = scalar_select %p80, %s81, %s82
      %p86 = pneg %p80
      %p87 = scmp.eq.s32.totalorder %s18, 1
      %p88 = por %p86, %p87
      %p89 = scmp.ne.s32.totalorder %s81, %s84
      %p90 = scmp.eq.s32.totalorder %s18, 0
      %p91 = por %p89, %p90
      %p92 = scmp.ne.s32.totalorder %s81, %s84
      %p93 = scmp.eq.s32.totalorder %s23, 1
      %p94 = por %p92, %p93
      %p95 = scmp.ne.s32.totalorder %s84, %s85
      %p96 = scmp.eq.s32.totalorder %s23, 0
      %p97 = por %p95, %p96
      %p98 = scmp.ne.s32.totalorder %s84, %s85
      %p99 = scmp.eq.s32.totalorder %s24, 1
      %p100 = por %p98, %p99
      %p102 = scmp.ne.s32.totalorder %s85, %s101
      %p103 = scmp.eq.s32.totalorder %s24, 0
      %p104 = por %p102, %p103
      %p105 = scmp.lt.s32.totalorder %s27, %s26
      %s106 = scalar_select %p105, %s27, %s26
      %p107 = scmp.lt.s32.totalorder %s36, %s40
      %s108 = scalar_select %p107, %s36, %s40
      %s109 = ssub.s32 %s25, %s44
      %s110 = ssub.s32 %s106, %s108
      %s111 = sor.u32 %s109, %s110
      %p112 = scmp.eq.s32.totalorder %s111, 0
      %s114 = sadd.s32 %s113, 1
      %s115 = scalar_select %p112, %s113, %s114
      %p118 = pneg %p112
      %p119 = scmp.eq.s32.totalorder %s18, 1
      %p120 = por %p118, %p119
      %p121 = scmp.ne.s32.totalorder %s113, %s116
      %p122 = scmp.eq.s32.totalorder %s18, 0
      %p123 = por %p121, %p122
      %p124 = scmp.ne.s32.totalorder %s113, %s116
      %p125 = scmp.eq.s32.totalorder %s23, 1
      %p126 = por %p124, %p125
      %p127 = scmp.ne.s32.totalorder %s116, %s117
      %p128 = scmp.eq.s32.totalorder %s23, 0
      %p129 = por %p127, %p128
      %p130 = scmp.ne.s32.totalorder %s116, %s117
      %p131 = scmp.eq.s32.totalorder %s24, 1
      %p132 = por %p130, %p131
      %p134 = scmp.ne.s32.totalorder %s117, %s133
      %p135 = scmp.eq.s32.totalorder %s24, 0
      %p136 = por %p134, %p135
      %s137 = ssub.s32 %s25, %s44
      %s138 = ssub.s32 %s26, %s40
      %s139 = sor.u32 %s137, %s138
      %p140 = scmp.eq.s32.totalorder %s139, 0
      %s142 = sadd.s32 %s141, 1
      %s143 = scalar_select %p140, %s141, %s142
      %p146 = pneg %p140
      %p147 = scmp.eq.s32.totalorder %s18, 1
      %p148 = por %p146, %p147
      %p149 = scmp.ne.s32.totalorder %s141, %s144
      %p150 = scmp.eq.s32.totalorder %s18, 0
      %p151 = por %p149, %p150
      %p152 = scmp.ne.s32.totalorder %s141, %s144
      %p153 = scmp.eq.s32.totalorder %s23, 1
      %p154 = por %p152, %p153
      %p155 = scmp.ne.s32.totalorder %s144, %s145
      %p156 = scmp.eq.s32.totalorder %s23, 0
      %p157 = por %p155, %p156
      %p158 = scmp.ne.s32.totalorder %s144, %s145
      %p159 = scmp.eq.s32.totalorder %s24, 1
      %p160 = por %p158, %p159
      %p162 = scmp.ne.s32.totalorder %s145, %s161
      %p163 = scmp.eq.s32.totalorder %s24, 0
      %p164 = por %p162, %p163
      %p165 = scmp.le.s32.totalorder 1, %s18
      %p166 = scmp.lt.s32.totalorder %s18, 3
      %p167 = pnand %p165, %p166
      %p168 = pneg %p167
      // Predicated region
      $region9: #{tpu_custom_call.1} parent=5 // pred_check
        _
      $region10: #{tpu_custom_call.1} parent=5 // pred_check_branch
        %170 = sbr.rel (%p167) target = $region12
      $region11: #{tpu_custom_call.1} parent=5 // pred_region
        %s171 = ssub.s32 %s18, 1
      $region12: #{tpu_custom_call.1} parent=5 // pred_fallthru
        _
      %p172 = scmp.lt.s32.totalorder %s18, 2
      // Predicated region
      $region13: #{tpu_custom_call.1} parent=5 // pred_check
        %p173 = pneg %p172
      $region14: #{tpu_custom_call.1} parent=5 // pred_check_branch
        %175 = sbr.rel (%p173) target = $region16
      $region15: #{tpu_custom_call.1} parent=5 // pred_region
        // Predicated region
        $region17: #{tpu_custom_call.1} parent=15 // pred_check
          %p176 = pneg %p59
        $region18: #{tpu_custom_call.1} parent=15 // pred_check_branch
          %178 = sbr.rel (%p176) target = $region20
        $region19: #{tpu_custom_call.1} parent=15 // pred_region
          %s179 = sand.u32 %s49, 1
          %s180 = scalar_lea.sflag [#allocation7], %s179
          %s181 = sand.u32 %s49, 1
          %s182 = smul.addr %s181, 32
          %s183 = scalar_lea.vmem [#allocation6], %s182
          %s184 = smul.u32 2, %s25
          %s185 = smul.u32 2, %s26
          %s187 = ssub.s32 512, 512
          %188 = vsyncadd %s180, %s187
          %s189 = smul.addr %s184, 2
          %s190 = sadd.s32 %s185, %s189
          %s191 = smul.addr %s190, 128
          %s192 = scalar_lea.hbm %s0, %s191
          %s193 = sshll.u32 %s183, 4
          %s194 = int_to_ptr.vmem [resolvable:$true] %s193
          %199 = dma.hbm_to_vmem [thread:$0]  %s192, 512, %s194, %s180, 128, 128, 8
        $region20: #{tpu_custom_call.1} parent=15 // pred_fallthru
          _
        // Predicated region
        $region21: #{tpu_custom_call.1} parent=15 // pred_check
          %p200 = pneg %p91
        $region22: #{tpu_custom_call.1} parent=15 // pred_check_branch
          %202 = sbr.rel (%p200) target = $region24
        $region23: #{tpu_custom_call.1} parent=15 // pred_region
          %s203 = sand.u32 %s18, 1
          %s204 = scalar_lea.sflag [#allocation10], %s203
          %s205 = sand.u32 %s81, 1
          %s206 = smul.addr %s205, 32
          %s207 = scalar_lea.vmem [#allocation9], %s206
          %p208 = scmp.lt.s32.totalorder %s27, %s26
          %s209 = scalar_select %p208, %s27, %s26
          %s210 = smul.u32 2, %s25
          %s211 = smul.u32 2, %s209
          %s213 = ssub.s32 512, 512
          %214 = vsyncadd %s204, %s213
          %s215 = smul.addr %s210, 2
          %s216 = sadd.s32 %s211, %s215
          %s217 = smul.addr %s216, 128
          %s218 = scalar_lea.hbm %s1, %s217
          %s219 = sshll.u32 %s207, 4
          %s220 = int_to_ptr.vmem [resolvable:$true] %s219
          %225 = dma.hbm_to_vmem [thread:$0]  %s218, 512, %s220, %s204, 128, 128, 8
        $region24: #{tpu_custom_call.1} parent=15 // pred_fallthru
          _
        // Predicated region
        $region25: #{tpu_custom_call.1} parent=15 // pred_check
          %p226 = pneg %p123
        $region26: #{tpu_custom_call.1} parent=15 // pred_check_branch
          %228 = sbr.rel (%p226) target = $region28
        $region27: #{tpu_custom_call.1} parent=15 // pred_region
          %s229 = sand.u32 %s18, 1
          %s230 = scalar_lea.sflag [#allocation10], %s229
          %s231 = sand.u32 %s113, 1
          %s232 = smul.addr %s231, 32
          %s233 = scalar_lea.vmem [#allocation11], %s232
          %p234 = scmp.lt.s32.totalorder %s27, %s26
          %s235 = scalar_select %p234, %s27, %s26
          %s236 = smul.u32 2, %s25
          %s237 = smul.u32 2, %s235
          %s239 = ssub.s32 512, 512
          %240 = vsyncadd %s230, %s239
          %s241 = smul.addr %s236, 2
          %s242 = sadd.s32 %s237, %s241
          %s243 = smul.addr %s242, 128
          %s244 = scalar_lea.hbm %s2, %s243
          %s245 = sshll.u32 %s233, 4
          %s246 = int_to_ptr.vmem [resolvable:$true] %s245
          %251 = dma.hbm_to_vmem [thread:$0]  %s244, 512, %s246, %s230, 128, 128, 8
        $region28: #{tpu_custom_call.1} parent=15 // pred_fallthru
          _
      $region16: #{tpu_custom_call.1} parent=5 // pred_fallthru
        _
      %p252 = scmp.le.s32.totalorder 1, %s18
      %p253 = scmp.lt.s32.totalorder %s18, 3
      %p254 = pnand %p252, %p253
      %p255 = pneg %p254
      // Predicated region
      $region29: #{tpu_custom_call.1} parent=5 // pred_check
        _
      $region30: #{tpu_custom_call.1} parent=5 // pred_check_branch
        %257 = sbr.rel (%p254) target = $region32
      $region31: #{tpu_custom_call.1} parent=5 // pred_region
        %s258 = ssub.s32 %s18, 1
        %s259 = sand.u32 %s52, 1
        %s260 = scalar_lea.sflag [#allocation7], %s259
        %s261 = sand.u32 %s52, 1
        %s262 = smul.addr %s261, 32
        %s263 = scalar_lea.vmem [#allocation6], %s262
        // Predicated region
        $region33: #{tpu_custom_call.1} parent=31 // pred_check
          %p264 = pneg %p65
        $region34: #{tpu_custom_call.1} parent=31 // pred_check_branch
          %266 = sbr.rel (%p264) target = $region36
        $region35: #{tpu_custom_call.1} parent=31 // pred_region
          %267 = dma.done %s260, 512
        $region36: #{tpu_custom_call.1} parent=31 // pred_fallthru
          _
        %s268 = sand.u32 %s23, 1
        %s269 = scalar_lea.sflag [#allocation10], %s268
        %s270 = sand.u32 %s84, 1
        %s271 = smul.addr %s270, 32
        %s272 = scalar_lea.vmem [#allocation9], %s271
        // Predicated region
        $region37: #{tpu_custom_call.1} parent=31 // pred_check
          %p273 = pneg %p97
        $region38: #{tpu_custom_call.1} parent=31 // pred_check_branch
          %275 = sbr.rel (%p273) target = $region40
        $region39: #{tpu_custom_call.1} parent=31 // pred_region
          %276 = dma.done %s269, 512
        $region40: #{tpu_custom_call.1} parent=31 // pred_fallthru
          _
        %s277 = sand.u32 %s23, 1
        %s278 = scalar_lea.sflag [#allocation10], %s277
        %s279 = sand.u32 %s116, 1
        %s280 = smul.addr %s279, 32
        %s281 = scalar_lea.vmem [#allocation11], %s280
        // Predicated region
        $region41: #{tpu_custom_call.1} parent=31 // pred_check
          %p282 = pneg %p129
        $region42: #{tpu_custom_call.1} parent=31 // pred_check_branch
          %284 = sbr.rel (%p282) target = $region44
        $region43: #{tpu_custom_call.1} parent=31 // pred_region
          %285 = dma.done %s278, 512
        $region44: #{tpu_custom_call.1} parent=31 // pred_fallthru
          _
        %s286 = sand.u32 %s52, 1
        %s287 = scalar_lea.sflag [#allocation7], %s286
        %s288 = sand.u32 %s52, 1
        %s289 = smul.addr %s288, 32
        %s290 = scalar_lea.vmem [#allocation6], %s289
        %p291 = pneg %p65
        %p292 = pneg %p62
        %s293 = sand.u32 %s23, 1
        %s294 = scalar_lea.sflag [#allocation10], %s293
        %s295 = sand.u32 %s84, 1
        %s296 = smul.addr %s295, 32
        %s297 = scalar_lea.vmem [#allocation9], %s296
        %p298 = pneg %p97
        %p299 = pneg %p94
        %s300 = sand.u32 %s23, 1
        %s301 = scalar_lea.sflag [#allocation10], %s300
        %s302 = sand.u32 %s116, 1
        %s303 = smul.addr %s302, 32
        %s304 = scalar_lea.vmem [#allocation11], %s303
        %p305 = pneg %p129
        %p306 = pneg %p126
        %p307 = pneg %p157
        %p308 = pneg %p154
        %s309 = sand.u32 %s144, 1
        %s310 = scalar_lea.sflag [#allocation8], %s309
        %s311 = sand.u32 %s144, 1
        %s312 = smul.addr %s311, 32
        %s313 = scalar_lea.vmem [#allocation12], %s312
        %s314 = smul.u32 2, %s28
        %s315 = smul.u32 2, %s29
        %p316 = scmp.lt.s32.totalorder %s30, %s29
        %s317 = scalar_select %p316, %s30, %s29
        %s318 = smul.u32 2, %s28
        %s319 = smul.u32 2, %s317
        %p320 = scmp.lt.s32.totalorder %s30, %s29
        %s321 = scalar_select %p320, %s30, %s29
        %s322 = smul.u32 2, %s28
        %s323 = smul.u32 2, %s321
        %s324 = smul.u32 2, %s28
        %s325 = smul.u32 2, %s29
        %p327 = scmp.eq.s32.totalorder %s30, 0
        // Predicated region
        $region45: #{tpu_custom_call.1} parent=31 // pred_check
          %p328 = pneg %p327
        $region46: #{tpu_custom_call.1} parent=31 // pred_check_branch
          %330 = sbr.rel (%p328) target = $region48
        $region47: #{tpu_custom_call.1} parent=31 // pred_region
          %vm331 = vcmask 7168
          %332 = vst.msk [vmem:[#allocation2] sm:$0xff] %vm331, -inf
          %333 = vst.msk [vmem:[#allocation2 + $0x8] sm:$0xff] %vm331, -inf
          %334 = vst.msk [vmem:[#allocation2 + $0x10] sm:$0xff] %vm331, -inf
          %335 = vst.msk [vmem:[#allocation2 + $0x18] sm:$0xff] %vm331, -inf
          %336 = vst.msk [vmem:[#allocation3] sm:$0xff] %vm331, 0.0
          %337 = vst.msk [vmem:[#allocation3 + $0x8] sm:$0xff] %vm331, 0.0
          %338 = vst.msk [vmem:[#allocation3 + $0x10] sm:$0xff] %vm331, 0.0
          %339 = vst.msk [vmem:[#allocation3 + $0x18] sm:$0xff] %vm331, 0.0
          %vm340 = vcmask 261120
          %341 = vst.msk [vmem:[#allocation4] sm:$0xff] %vm340, 0.0
          %342 = vst.msk [vmem:[#allocation4 + $0x8] sm:$0xff] %vm340, 0.0
          %343 = vst.msk [vmem:[#allocation4 + $0x10] sm:$0xff] %vm340, 0.0
          %344 = vst.msk [vmem:[#allocation4 + $0x18] sm:$0xff] %vm340, 0.0
          %v345 = vld [vmem:[%s263] sm:$0xff]
          %v346 = vld [vmem:[%s263 + $0x8] sm:$0xff]
          %v347 = vld [vmem:[%s263 + $0x10] sm:$0xff]
          %v348 = vld [vmem:[%s263 + $0x18] sm:$0xff]
          %v349 = vmul.f32 %v345, 0.17677669
          %v350 = vmul.f32 %v346, 0.17677669
          %v351 = vmul.f32 %v347, 0.17677669
          %v352 = vmul.f32 %v348, 0.17677669
          %v353 = vpack.c.bf16 %v350, %v349
          %v354 = vpack.c.bf16 %v352, %v351
          %355 = vst.msk [vmem:[#allocation5] sm:$0xff] %vm340, %v353
          %356 = vst.msk [vmem:[#allocation5 + $0x8] sm:$0xff] %vm340, %v354
        $region48: #{tpu_custom_call.1} parent=31 // pred_fallthru
          _
        %p357 = scmp.le.s32.totalorder %s30, %s29
        // Predicated region
        $region49: #{tpu_custom_call.1} parent=31 // pred_check
          %p358 = pneg %p357
        $region50: #{tpu_custom_call.1} parent=31 // pred_check_branch
          %360 = sbr.rel (%p358) target = $region52
        $region51: #{tpu_custom_call.1} parent=31 // pred_region
          %v361 = vld [vmem:[#allocation5] sm:$0xff]
          %v362 = vld [vmem:[#allocation5 + $0x8] sm:$0xff]
          %v363 = vld [vmem:[%s272] sm:$0xff]
          %v364 = vld [vmem:[%s272 + $0x8] sm:$0xff]
          %v365 = vld [vmem:[%s272 + $0x10] sm:$0xff]
          %v366 = vld [vmem:[%s272 + $0x18] sm:$0xff]
          %v367 = vpack.c.bf16 %v364, %v363
          %v368 = vpack.c.bf16 %v366, %v365
          %vm369 = vcmask 261120
          %v371 = vsel %vm369, %v361, 0
          %v374 = vsel %vm369, %v367, 0
          %376 = vmatprep.subr.bf16.mxu0 0
          %377 = vmatpush1.bf16.xpose.msra.mxu0 %v374
          %378 = vmatprep.subr.bf16.mxu0 0
          %379 = vmatpush1.bf16.xpose.msra.mxu0 0
          %380 = vmatprep.subr.bf16.mxu0 0
          %381 = vmatpush1.bf16.xpose.msra.mxu0 0
          %382 = vmatprep.subr.bf16.mxu0 0
          %383 = vmatpush1.bf16.xpose.msra.mxu0 0
          %384 = vmatprep.subr.bf16.mxu0 0
          %385 = vmatpush1.bf16.xpose.msra.mxu0 0
          %386 = vmatprep.subr.bf16.mxu0 0
          %387 = vmatpush1.bf16.xpose.msra.mxu0 0
          %388 = vmatprep.subr.bf16.mxu0 0
          %389 = vmatpush1.bf16.xpose.msra.mxu0 0
          %390 = vmatprep.subr.bf16.mxu0 0
          %391 = vmatpush1.bf16.xpose.msra.mxu0 0
          %392 = vmatprep.subr.bf16.mxu0 0
          %393 = vmatpush1.bf16.xpose.msra.mxu0 0
          %394 = vmatprep.subr.bf16.mxu0 0
          %395 = vmatpush1.bf16.xpose.msra.mxu0 0
          %396 = vmatprep.subr.bf16.mxu0 0
          %397 = vmatpush1.bf16.xpose.msra.mxu0 0
          %398 = vmatprep.subr.bf16.mxu0 0
          %399 = vmatpush1.bf16.xpose.msra.mxu0 0
          %400 = vmatprep.subr.bf16.mxu0 0
          %401 = vmatpush1.bf16.xpose.msra.mxu0 0
          %402 = vmatprep.subr.bf16.mxu0 0
          %403 = vmatpush1.bf16.xpose.msra.mxu0 0
          %404 = vmatprep.subr.bf16.mxu0 0
          %405 = vmatpush1.bf16.xpose.msra.mxu0 0
          %406 = vmatprep.subr.bf16.mxu0 0
          %407 = vmatpush1.bf16.xpose.msra.mxu0 0
          %408 = vmatprep.mubr.bf16.mxu0 0
          %409 = vmatmul.mubr.bf16.gmra.mrb[0].mxu0 %v371
          %v410 = vpop.f32.mrb[0].mxu0
          %v411 = vadd.f32 0.0, %v410
          %v412 = vpop.f32.mrb[0].mxu0
          %v413 = vpop.f32.mrb[0].mxu0
          %v414 = vadd.f32 0.0, %v413
          %v415 = vpop.f32.mrb[0].mxu0
          %416 = vdwg.mxu0
          %v418 = vsel %vm369, %v362, 0
          %v421 = vsel %vm369, %v368, 0
          %423 = vmatprep.subr.bf16.mxu0 0
          %424 = vmatpush1.bf16.xpose.msra.mxu0 %v421
          %425 = vmatprep.subr.bf16.mxu0 0
          %426 = vmatpush1.bf16.xpose.msra.mxu0 0
          %427 = vmatprep.subr.bf16.mxu0 0
          %428 = vmatpush1.bf16.xpose.msra.mxu0 0
          %429 = vmatprep.subr.bf16.mxu0 0
          %430 = vmatpush1.bf16.xpose.msra.mxu0 0
          %431 = vmatprep.subr.bf16.mxu0 0
          %432 = vmatpush1.bf16.xpose.msra.mxu0 0
          %433 = vmatprep.subr.bf16.mxu0 0
          %434 = vmatpush1.bf16.xpose.msra.mxu0 0
          %435 = vmatprep.subr.bf16.mxu0 0
          %436 = vmatpush1.bf16.xpose.msra.mxu0 0
          %437 = vmatprep.subr.bf16.mxu0 0
          %438 = vmatpush1.bf16.xpose.msra.mxu0 0
          %439 = vmatprep.subr.bf16.mxu0 0
          %440 = vmatpush1.bf16.xpose.msra.mxu0 0
          %441 = vmatprep.subr.bf16.mxu0 0
          %442 = vmatpush1.bf16.xpose.msra.mxu0 0
          %443 = vmatprep.subr.bf16.mxu0 0
          %444 = vmatpush1.bf16.xpose.msra.mxu0 0
          %445 = vmatprep.subr.bf16.mxu0 0
          %446 = vmatpush1.bf16.xpose.msra.mxu0 0
          %447 = vmatprep.subr.bf16.mxu0 0
          %448 = vmatpush1.bf16.xpose.msra.mxu0 0
          %449 = vmatprep.subr.bf16.mxu0 0
          %450 = vmatpush1.bf16.xpose.msra.mxu0 0
          %451 = vmatprep.subr.bf16.mxu0 0
          %452 = vmatpush1.bf16.xpose.msra.mxu0 0
          %453 = vmatprep.subr.bf16.mxu0 0
          %454 = vmatpush1.bf16.xpose.msra.mxu0 0
          %455 = vmatprep.mubr.bf16.mxu0 0
          %456 = vmatmul.mubr.bf16.gmra.mrb[0].mxu0 %v418
          %v457 = vpop.f32.mrb[0].mxu0
          %v458 = vadd.f32 0.0, %v457
          %v459 = vpop.f32.mrb[0].mxu0
          %v460 = vpop.f32.mrb[0].mxu0
          %v461 = vadd.f32 0.0, %v460
          %v462 = vpop.f32.mrb[0].mxu0
          %463 = vdwg.mxu0
          %v464 = vlaneseq
          %v465 = vand.u32 %v464, 127
          %s466 = smul.u32 %s30, 16
          %v467 = vstv %s466
          %v468 = vadd.s32 %v465, %v467
          %v469 = vlaneseq
          %v470 = vshrl.u32 %v469, 7
          %v471 = vadd.s32 %v470, 8
          %s472 = smul.u32 %s29, 16
          %v473 = vstv %s472
          %v474 = vadd.s32 %v470, %v473
          %v475 = vadd.s32 %v471, %v473
          %vm476 = vcmp.le.s32.totalorder %v468, %v474
          %vm477 = vcmp.le.s32.totalorder %v468, %v475
          %v478 = vsel %vm476, 1, 0
          %v479 = vsel %vm477, 1, 0
          %vm480 = vcmp.eq.s32.totalorder %v478, 1
          %vm481 = vcmp.eq.s32.totalorder %v479, 1
          %v482 = vsel %vm480, %v411, -inf
          %v483 = vsel %vm481, %v414, -inf
          %v484 = vsel %vm480, %v458, -inf
          %v485 = vsel %vm481, %v461, -inf
          %v486 = vld [vmem:[#allocation2] sm:$0xff]
          %v487 = vld [vmem:[#allocation2 + $0x8] sm:$0xff]
          %v488 = vld [vmem:[#allocation2 + $0x10] sm:$0xff]
          %v489 = vld [vmem:[#allocation2 + $0x18] sm:$0xff]
          %vm490 = vcmask 130048
          %v491 = vsel %vm490, %v482, -inf
          %492 = vmax.xlane.f32.xlu0 %v491
          %v493 = vpop.xlane.xlu0 %492
          %v494 = vsel %vm490, %v483, -inf
          %495 = vmax.xlane.f32.xlu0 %v494
          %v496 = vpop.xlane.xlu0 %495
          %v497 = vsel %vm490, %v484, -inf
          %498 = vmax.xlane.f32.xlu0 %v497
          %v499 = vpop.xlane.xlu0 %498
          %v500 = vsel %vm490, %v485, -inf
          %501 = vmax.xlane.f32.xlu0 %v500
          %v502 = vpop.xlane.xlu0 %501
          %v503 = vmax.f32 %v486, %v493
          %v504 = vmax.f32 %v487, %v496
          %v505 = vmax.f32 %v488, %v499
          %v506 = vmax.f32 %v489, %v502
          %v507 = vsub.f32 %v486, %v503
          %v508 = vsub.f32 %v487, %v504
          %v509 = vsub.f32 %v488, %v505
          %v510 = vsub.f32 %v489, %v506
          %v511 = vmul.f32 %v507, 1.442695
          %v512 = vpow.pop %v511
          %v513 = vmul.f32 %v508, 1.442695
          %v514 = vpow.pop %v513
          %v515 = vmul.f32 %v509, 1.442695
          %v516 = vpow.pop %v515
          %v517 = vmul.f32 %v510, 1.442695
          %v518 = vpow.pop %v517
          %520 = vset.pattern.permute.xlu0 0
          %521 = vperm.xlu0 %520, %v503
          %v522 = vpop.permute.xlu0 %521
          %525 = vset.pattern.permute.xlu0 0
          %526 = vperm.xlu0 %525, %v504
          %v527 = vpop.permute.xlu0 %526
          %530 = vset.pattern.permute.xlu0 0
          %531 = vperm.xlu0 %530, %v505
          %v532 = vpop.permute.xlu0 %531
          %535 = vset.pattern.permute.xlu0 0
          %536 = vperm.xlu0 %535, %v506
          %v537 = vpop.permute.xlu0 %536
          %v539 = vsub.f32 %v482, %v522
          %v540 = vsub.f32 %v483, %v527
          %v541 = vsub.f32 %v484, %v532
          %v542 = vsub.f32 %v485, %v537
          %v543 = vmul.f32 %v539, 1.442695
          %v544 = vpow.pop %v543
          %v545 = vmul.f32 %v540, 1.442695
          %v546 = vpow.pop %v545
          %v547 = vmul.f32 %v541, 1.442695
          %v548 = vpow.pop %v547
          %v549 = vmul.f32 %v542, 1.442695
          %v550 = vpow.pop %v549
          %v551 = vld [vmem:[#allocation3] sm:$0xff]
          %v552 = vld [vmem:[#allocation3 + $0x8] sm:$0xff]
          %v553 = vld [vmem:[#allocation3 + $0x10] sm:$0xff]
          %v554 = vld [vmem:[#allocation3 + $0x18] sm:$0xff]
          %v555 = vmul.f32 %v512, %v551
          %v556 = vmul.f32 %v514, %v552
          %v557 = vmul.f32 %v516, %v553
          %v558 = vmul.f32 %v518, %v554
          %v559 = vsel %vm490, %v544, 0.0
          %560 = vadd.xlane.f32.xlu0 %v559
          %v561 = vpop.xlane.xlu0 %560
          %v562 = vsel %vm490, %v546, 0.0
          %563 = vadd.xlane.f32.xlu0 %v562
          %v564 = vpop.xlane.xlu0 %563
          %v565 = vsel %vm490, %v548, 0.0
          %566 = vadd.xlane.f32.xlu0 %v565
          %v567 = vpop.xlane.xlu0 %566
          %v568 = vsel %vm490, %v550, 0.0
          %569 = vadd.xlane.f32.xlu0 %v568
          %v570 = vpop.xlane.xlu0 %569
          %v571 = vadd.f32 %v555, %v561
          %v572 = vadd.f32 %v556, %v564
          %v573 = vadd.f32 %v557, %v567
          %v574 = vadd.f32 %v558, %v570
          %vm575 = vcmask 7168
          %576 = vst.msk [vmem:[#allocation3] sm:$0xff] %vm575, %v571
          %577 = vst.msk [vmem:[#allocation3 + $0x8] sm:$0xff] %vm575, %v572
          %578 = vst.msk [vmem:[#allocation3 + $0x10] sm:$0xff] %vm575, %v573
          %579 = vst.msk [vmem:[#allocation3 + $0x18] sm:$0xff] %vm575, %v574
          %v580 = vld [vmem:[#allocation4] sm:$0xff]
          %v581 = vld [vmem:[#allocation4 + $0x8] sm:$0xff]
          %v582 = vld [vmem:[#allocation4 + $0x10] sm:$0xff]
          %v583 = vld [vmem:[#allocation4 + $0x18] sm:$0xff]
          %585 = vset.pattern.permute.xlu0 0
          %586 = vperm.xlu0 %585, %v512
          %v587 = vpop.permute.xlu0 %586
          %590 = vset.pattern.permute.xlu0 0
          %591 = vperm.xlu0 %590, %v514
          %v592 = vpop.permute.xlu0 %591
          %595 = vset.pattern.permute.xlu0 0
          %596 = vperm.xlu0 %595, %v516
          %v597 = vpop.permute.xlu0 %596
          %600 = vset.pattern.permute.xlu0 0
          %601 = vperm.xlu0 %600, %v518
          %v602 = vpop.permute.xlu0 %601
          %v604 = vmul.f32 %v587, %v580
          %v605 = vmul.f32 %v592, %v581
          %v606 = vmul.f32 %v597, %v582
          %v607 = vmul.f32 %v602, %v583
          %v608 = vpack.c.bf16 %v546, %v544
          %v609 = vpack.c.bf16 %v550, %v548
          %v610 = vld [vmem:[%s281] sm:$0xff]
          %v611 = vld [vmem:[%s281 + $0x8] sm:$0xff]
          %v612 = vld [vmem:[%s281 + $0x10] sm:$0xff]
          %v613 = vld [vmem:[%s281 + $0x18] sm:$0xff]
          %v614 = vpack.c.bf16 %v611, %v610
          %v615 = vpack.c.bf16 %v613, %v612
          %v617 = vsel %vm490, %v608, 0
          %619 = vmatprep.subr.bf16.mxu0 0
          %620 = vmatpush1.bf16.msra.mxu0 %v614
          %621 = vmatprep.subr.bf16.mxu0 0
          %622 = vmatpush1.bf16.msra.mxu0 0
          %623 = vmatprep.subr.bf16.mxu0 0
          %624 = vmatpush1.bf16.msra.mxu0 0
          %625 = vmatprep.subr.bf16.mxu0 0
          %626 = vmatpush1.bf16.msra.mxu0 0
          %627 = vmatprep.subr.bf16.mxu0 0
          %628 = vmatpush1.bf16.msra.mxu0 0
          %629 = vmatprep.subr.bf16.mxu0 0
          %630 = vmatpush1.bf16.msra.mxu0 0
          %631 = vmatprep.subr.bf16.mxu0 0
          %632 = vmatpush1.bf16.msra.mxu0 0
          %633 = vmatprep.subr.bf16.mxu0 0
          %634 = vmatpush1.bf16.msra.mxu0 0
          %635 = vmatprep.subr.bf16.mxu0 0
          %636 = vmatpush1.bf16.msra.mxu0 0
          %637 = vmatprep.subr.bf16.mxu0 0
          %638 = vmatpush1.bf16.msra.mxu0 0
          %639 = vmatprep.subr.bf16.mxu0 0
          %640 = vmatpush1.bf16.msra.mxu0 0
          %641 = vmatprep.subr.bf16.mxu0 0
          %642 = vmatpush1.bf16.msra.mxu0 0
          %643 = vmatprep.subr.bf16.mxu0 0
          %644 = vmatpush1.bf16.msra.mxu0 0
          %645 = vmatprep.subr.bf16.mxu0 0
          %646 = vmatpush1.bf16.msra.mxu0 0
          %647 = vmatprep.subr.bf16.mxu0 0
          %648 = vmatpush1.bf16.msra.mxu0 0
          %649 = vmatprep.subr.bf16.mxu0 0
          %650 = vmatpush1.bf16.msra.mxu0 0
          %651 = vmatprep.mubr.bf16.mxu0 0
          %652 = vmatmul.mubr.bf16.gmra.mrb[0].mxu0 %v617
          %v653 = vpop.f32.mrb[0].mxu0
          %v654 = vadd.f32 0.0, %v653
          %v655 = vpop.f32.mrb[0].mxu0
          %v656 = vpop.f32.mrb[0].mxu0
          %v657 = vadd.f32 0.0, %v656
          %v658 = vpop.f32.mrb[0].mxu0
          %659 = vdwg.mxu0
          %v661 = vsel %vm490, %v609, 0
          %663 = vmatprep.subr.bf16.mxu0 0
          %664 = vmatpush1.bf16.msra.mxu0 %v615
          %665 = vmatprep.subr.bf16.mxu0 0
          %666 = vmatpush1.bf16.msra.mxu0 0
          %667 = vmatprep.subr.bf16.mxu0 0
          %668 = vmatpush1.bf16.msra.mxu0 0
          %669 = vmatprep.subr.bf16.mxu0 0
          %670 = vmatpush1.bf16.msra.mxu0 0
          %671 = vmatprep.subr.bf16.mxu0 0
          %672 = vmatpush1.bf16.msra.mxu0 0
          %673 = vmatprep.subr.bf16.mxu0 0
          %674 = vmatpush1.bf16.msra.mxu0 0
          %675 = vmatprep.subr.bf16.mxu0 0
          %676 = vmatpush1.bf16.msra.mxu0 0
          %677 = vmatprep.subr.bf16.mxu0 0
          %678 = vmatpush1.bf16.msra.mxu0 0
          %679 = vmatprep.subr.bf16.mxu0 0
          %680 = vmatpush1.bf16.msra.mxu0 0
          %681 = vmatprep.subr.bf16.mxu0 0
          %682 = vmatpush1.bf16.msra.mxu0 0
          %683 = vmatprep.subr.bf16.mxu0 0
          %684 = vmatpush1.bf16.msra.mxu0 0
          %685 = vmatprep.subr.bf16.mxu0 0
          %686 = vmatpush1.bf16.msra.mxu0 0
          %687 = vmatprep.subr.bf16.mxu0 0
          %688 = vmatpush1.bf16.msra.mxu0 0
          %689 = vmatprep.subr.bf16.mxu0 0
          %690 = vmatpush1.bf16.msra.mxu0 0
          %691 = vmatprep.subr.bf16.mxu0 0
          %692 = vmatpush1.bf16.msra.mxu0 0
          %693 = vmatprep.subr.bf16.mxu0 0
          %694 = vmatpush1.bf16.msra.mxu0 0
          %695 = vmatprep.mubr.bf16.mxu0 0
          %696 = vmatmul.mubr.bf16.gmra.mrb[0].mxu0 %v661
          %v697 = vpop.f32.mrb[0].mxu0
          %v698 = vadd.f32 0.0, %v697
          %v699 = vpop.f32.mrb[0].mxu0
          %v700 = vpop.f32.mrb[0].mxu0
          %v701 = vadd.f32 0.0, %v700
          %v702 = vpop.f32.mrb[0].mxu0
          %703 = vdwg.mxu0
          %v704 = vadd.f32 %v604, %v654
          %v705 = vadd.f32 %v605, %v657
          %v706 = vadd.f32 %v606, %v698
          %v707 = vadd.f32 %v607, %v701
          %708 = vst.msk [vmem:[#allocation4] sm:$0xff] %vm369, %v704
          %709 = vst.msk [vmem:[#allocation4 + $0x8] sm:$0xff] %vm369, %v705
          %710 = vst.msk [vmem:[#allocation4 + $0x10] sm:$0xff] %vm369, %v706
          %711 = vst.msk [vmem:[#allocation4 + $0x18] sm:$0xff] %vm369, %v707
          %712 = vst.msk [vmem:[#allocation2] sm:$0xff] %vm575, %v503
          %713 = vst.msk [vmem:[#allocation2 + $0x8] sm:$0xff] %vm575, %v504
          %714 = vst.msk [vmem:[#allocation2 + $0x10] sm:$0xff] %vm575, %v505
          %715 = vst.msk [vmem:[#allocation2 + $0x18] sm:$0xff] %vm575, %v506
        $region52: #{tpu_custom_call.1} parent=31 // pred_fallthru
          _
        %p716 = scmp.eq.s32.totalorder %s30, %s29
        // Predicated region
        $region53: #{tpu_custom_call.1} parent=31 // pred_check
          %p717 = pneg %p716
        $region54: #{tpu_custom_call.1} parent=31 // pred_check_branch
          %719 = sbr.rel (%p717) target = $region56
        $region55: #{tpu_custom_call.1} parent=31 // pred_region
          %v720 = vld [vmem:[#allocation3] sm:$0xff]
          %v721 = vld [vmem:[#allocation3 + $0x8] sm:$0xff]
          %v722 = vld [vmem:[#allocation3 + $0x10] sm:$0xff]
          %v723 = vld [vmem:[#allocation3 + $0x18] sm:$0xff]
          %v724 = vrcp.pop %v720
          %v725 = vrcp.pop %v721
          %v726 = vrcp.pop %v722
          %v727 = vrcp.pop %v723
          %v728 = vld [vmem:[#allocation4] sm:$0xff]
          %v729 = vld [vmem:[#allocation4 + $0x8] sm:$0xff]
          %v730 = vld [vmem:[#allocation4 + $0x10] sm:$0xff]
          %v731 = vld [vmem:[#allocation4 + $0x18] sm:$0xff]
          %733 = vset.pattern.permute.xlu0 0
          %734 = vperm.xlu0 %733, %v724
          %v735 = vpop.permute.xlu0 %734
          %738 = vset.pattern.permute.xlu0 0
          %739 = vperm.xlu0 %738, %v725
          %v740 = vpop.permute.xlu0 %739
          %743 = vset.pattern.permute.xlu0 0
          %744 = vperm.xlu0 %743, %v726
          %v745 = vpop.permute.xlu0 %744
          %748 = vset.pattern.permute.xlu0 0
          %749 = vperm.xlu0 %748, %v727
          %v750 = vpop.permute.xlu0 %749
          %v752 = vmul.f32 %v728, %v735
          %v753 = vmul.f32 %v729, %v740
          %v754 = vmul.f32 %v730, %v745
          %v755 = vmul.f32 %v731, %v750
          %vm756 = vcmask 261120
          %757 = vst.msk [vmem:[%s313] sm:$0xff] %vm756, %v752
          %758 = vst.msk [vmem:[%s313 + $0x8] sm:$0xff] %vm756, %v753
          %759 = vst.msk [vmem:[%s313 + $0x10] sm:$0xff] %vm756, %v754
          %760 = vst.msk [vmem:[%s313 + $0x18] sm:$0xff] %vm756, %v755
        $region56: #{tpu_custom_call.1} parent=31 // pred_fallthru
          _
        %s761 = sand.u32 %s144, 1
        %s762 = scalar_lea.sflag [#allocation8], %s761
        %s763 = sand.u32 %s144, 1
        %s764 = smul.addr %s763, 32
        %s765 = scalar_lea.vmem [#allocation12], %s764
        // Predicated region
        $region57: #{tpu_custom_call.1} parent=31 // pred_check
          %p766 = pneg %p154
        $region58: #{tpu_custom_call.1} parent=31 // pred_check_branch
          %768 = sbr.rel (%p766) target = $region60
        $region59: #{tpu_custom_call.1} parent=31 // pred_region
          %s769 = smul.u32 2, %s28
          %s770 = smul.u32 2, %s29
          %s772 = ssub.s32 512, 512
          %773 = vsyncadd %s762, %s772
          %s774 = smul.addr %s769, 2
          %s775 = sadd.s32 %s770, %s774
          %s776 = smul.addr %s775, 128
          %s777 = scalar_lea.hbm %s3, %s776
          %s778 = sshll.u32 %s765, 4
          %s779 = int_to_ptr.vmem [resolvable:$true] %s778
          %784 = dma.vmem_to_hbm [thread:$0]  %s779, 512, %s777, %s762, 128, 128, 8
        $region60: #{tpu_custom_call.1} parent=31 // pred_fallthru
          _
      $region32: #{tpu_custom_call.1} parent=5 // pred_fallthru
        _
      %p785 = scmp.le.s32.totalorder 2, %s18
      // Predicated region
      $region61: #{tpu_custom_call.1} parent=5 // pred_check
        %p786 = pneg %p785
      $region62: #{tpu_custom_call.1} parent=5 // pred_check_branch
        %788 = sbr.rel (%p786) target = $region64
      $region63: #{tpu_custom_call.1} parent=5 // pred_region
        %s789 = ssub.s32 %s18, 2
        // Predicated region
        $region65: #{tpu_custom_call.1} parent=63 // pred_check
          %p790 = pneg %p160
        $region66: #{tpu_custom_call.1} parent=63 // pred_check_branch
          %792 = sbr.rel (%p790) target = $region68
        $region67: #{tpu_custom_call.1} parent=63 // pred_region
          %s793 = sand.u32 %s145, 1
          %s794 = scalar_lea.sflag [#allocation8], %s793
          %s795 = sand.u32 %s145, 1
          %s796 = smul.addr %s795, 32
          %s797 = scalar_lea.vmem [#allocation12], %s796
          %798 = dma.done %s794, 512
        $region68: #{tpu_custom_call.1} parent=63 // pred_fallthru
          _
      $region64: #{tpu_custom_call.1} parent=5 // pred_fallthru
        _
    $region6: #{tpu_custom_call.1} parent=1 // loop_footer
      %s22 = sadd.s32 1, %s18
    $region7: #{tpu_custom_call.1} parent=1 // loop_footer_branch
      %17 = sbr.rel target = $region3
    $region8: #{tpu_custom_call.1} parent=1 // loop_exit
      _
    %799 = vsyncpa [#allocation7], 1
    %s800 = scalar_lea.sflag [#allocation7], 1
    %801 = vsyncpa %s800, 1
    %802 = vsyncpa [#allocation10], 1
    %s803 = scalar_lea.sflag [#allocation10], 1
    %804 = vsyncpa %s803, 1
    %805 = vsyncpa [#allocation8], 1
    %s806 = scalar_lea.sflag [#allocation8], 1
    %807 = vsyncpa %s806, 1

</llo_original>
